<compile_context>
chip_gen: v6e
topology: v6e:2x2x1
jax: 0.10.0
libtpu: 0.0.40
codegen_flags: <defaults>
</compile_context>

<pallas_src>
import functools
import math

import jax
import jax.numpy as jnp
from jax.experimental import pallas as pl
from jax.experimental.pallas import tpu as pltpu


def _label_smoothing_kernel(x_ref, tgt_ref, out_ref, *,
                            padding_idx, size, confidence, smooth,
                            c_const, s_const, tile_v):
    j = pl.program_id(1)                      # vocab-tile index (reduction axis)
    off = j * tile_v                          # scalar global column offset

    x = x_ref[...].astype(jnp.float32)        # (tn, tv) log-probs, f32 in-register
    tgt = tgt_ref[...]                        # (tn, 1) int32 targets
    tn, tv = x.shape

    # Tile-local column iota kept at (1, tv); all comparisons broadcast it.
    col = jax.lax.broadcasted_iota(jnp.int32, (1, tv), 1)

    # Shift target / constants into tile-local coordinates (scalar / (tn,1) work
    # only — no full-width iota offset add).
    tgt_local = tgt - off                                        # (tn, 1)
    pad_local = padding_idx - off                                # scalar
    size_local = size - off                                      # scalar

    row_pad = tgt == padding_idx                                 # (tn, 1)
    col_bad = (col == pad_local) | (col >= size_local)           # (1, tv)
    zero = row_pad | col_bad                                     # (tn, tv)

    is_tgt = col == tgt_local                                    # (tn, tv)

    # Per-element KL contribution t*(log t - x) with log t constant-folded:
    #   target col : confidence*log(confidence) - confidence*x
    #   other cols : smooth*log(smooth)         - smooth*x
    #   padded row / padding col / col >= size (OOB) : 0
    coef = jnp.where(is_tgt, jnp.float32(confidence), jnp.float32(smooth))
    const = jnp.where(is_tgt, jnp.float32(c_const), jnp.float32(s_const))
    # Select-based (never multiply-based) masking: garbage from OOB block reads
    # (rows past N, cols past V) cannot propagate NaN/Inf into the sum.
    contrib = jnp.where(zero, jnp.float32(0.0), const - coef * x)

    # Fold rows into a vreg-shaped (8, tv) partial (pure VALU vreg adds, no XLU),
    # then fold lane groups down to a single (8, 128) vreg before writeback.
    # TODO(synk): verify in the Mosaic dump this stays a vreg regroup (no full
    # (tn, tv) f32 VMEM temp); if it materialises, switch to an unrolled
    # lax.fori_loop over 8-row slices accumulating into the (8, 128) partial.
    partial = contrib.reshape(tn // 8, 8, tv).sum(axis=0)
    partial = partial.reshape(8, tv // 128, 128).sum(axis=1)

    @pl.when(j == 0)
    def _():
        out_ref[...] = jnp.zeros_like(out_ref)

    out_ref[...] += partial


def label_smoothing_loss(x, target, *, size, padding_idx, smoothing=0.0,
                         tile_n=None, tile_v=None):
    """x: (N, size) log-probs (f32 or bf16); target: (N,) ints. Returns scalar f32."""
    n, v = x.shape
    assert v == size, "x.shape[1] must equal size"
    assert size > 2, "size must be > 2 (smoothing / (size - 2))"

    confidence = 1.0 - smoothing
    smooth = smoothing / (size - 2)
    # Constant-fold log(true_dist); guard log(0) for degenerate settings
    # (those branches contribute exactly 0 anyway).
    c_const = confidence * math.log(confidence) if confidence > 0.0 else 0.0
    s_const = smooth * math.log(smooth) if smooth > 0.0 else 0.0

    itemsize = jnp.dtype(x.dtype).itemsize

    # Vocab tile: always lane-dense (multiple of 128). Ceil-div grid + in-kernel
    # `col >= size` masking means tv never has to divide V.
    if tile_v is not None:
        tv = int(tile_v)
    else:
        tv = min(2048, ((v + 127) // 128) * 128)
    assert tv % 128 == 0, tv

    # Row tile: multiple of 8; ~2M-element x blocks (~8 MiB f32 / 4 MiB bf16) to
    # amortize the ~0.35 us per-grid-step overhead.
    n8 = ((n + 7) // 8) * 8
    if tile_n is not None:
        tn = int(tile_n)
    else:
        budget_rows = max(8, (2 * 1024 * 1024) // tv)
        tn = min(1024, budget_rows, n8)
        tn -= tn % 8
        tn = max(tn, 8)
        # Guarantee >= 2 row tiles whenever possible so the "parallel" row axis
        # can shard across both v7x TensorCores.
        if n8 >= 16 and tn > n8 // 2:
            half = n8 // 2
            tn = max(8, half - (half % 8))
    assert tn % 8 == 0, tn

    grid_rows = -(-n // tn)
    grid_v = -(-v // tv)
    grid = (grid_rows, grid_v)

    # Only the (tiny) target array is padded; x is never copied / padded in HBM.
    # Rows read past N are zeroed in-kernel by the select on tgt == padding_idx.
    n_pad = grid_rows * tn
    tgt2d = target.astype(jnp.int32).reshape(n, 1)
    if n_pad != n:
        tgt2d = jnp.pad(tgt2d, ((0, n_pad - n), (0, 0)),
                        constant_values=padding_idx)

    kernel = functools.partial(
        _label_smoothing_kernel,
        padding_idx=int(padding_idx),
        size=int(size),
        confidence=float(confidence),
        smooth=float(smooth),
        c_const=float(c_const),
        s_const=float(s_const),
        tile_v=tv,
    )

    # Double-buffered x blocks + possible f32 contrib intermediate + headroom,
    # capped below v7x's 64 MiB physical VMEM.
    block_bytes = tn * tv * itemsize
    vmem_limit = int(min(56 * 2 ** 20,
                         max(16 * 2 ** 20,
                             4 * block_bytes + tn * tv * 4 + 2 * 2 ** 20)))

    partials = pl.pallas_call(
        kernel,
        out_shape=jax.ShapeDtypeStruct((grid_rows * 8, 128), jnp.float32),
        grid=grid,
        in_specs=[
            pl.BlockSpec((tn, tv), lambda i, j: (i, j)),   # x tile (native dtype)
            pl.BlockSpec((tn, 1), lambda i, j: (i, 0)),    # target slice per row tile
        ],
        # Lane-dense (8, 128) partial per row tile, resident across the vocab axis.
        out_specs=pl.BlockSpec((8, 128), lambda i, j: (i, 0)),
        compiler_params=pltpu.CompilerParams(
            dimension_semantics=("parallel", "arbitrary"),
            vmem_limit_bytes=vmem_limit,
        ),
    )(x, tgt2d)

    return jnp.sum(partials)


def _reference(x, target, *, size, padding_idx, smoothing):
    confidence = 1.0 - smoothing
    x = x.astype(jnp.float32)
    n, v = x.shape
    col = jnp.arange(v)[None, :]
    tgt = target[:, None]
    td = jnp.where(col == tgt, confidence, smoothing / (size - 2))
    td = jnp.where(col == padding_idx, 0.0, td)
    td = jnp.where(tgt == padding_idx, 0.0, td)
    safe = jnp.where(td > 0, td, 1.0)
    return jnp.sum(jnp.where(td > 0, td * (jnp.log(safe) - x), 0.0))


if __name__ == "__main__":
    key = jax.random.PRNGKey(0)
    k1, k2, k3, k4, k5, k6 = jax.random.split(key, 6)

    padding_idx = 0
    smoothing = 0.1

    # --- Test 1: small aligned shapes (rows = 8, vocab = 32), single block -----
    N, V = 8, 32
    logits = jax.random.normal(k1, (N, V), dtype=jnp.float32)
    x = jax.nn.log_softmax(logits, axis=-1)
    target = jax.random.randint(k2, (N,), 0, V, dtype=jnp.int32)
    target = target.at[3].set(padding_idx)   # exercise the padded-row path

    loss = label_smoothing_loss(x, target, size=V,
                                padding_idx=padding_idx, smoothing=smoothing)
    loss = jax.block_until_ready(loss)
    ref = _reference(x, target, size=V, padding_idx=padding_idx, smoothing=smoothing)
    assert jnp.allclose(loss, ref, rtol=1e-5, atol=1e-5), (loss, ref)

    # --- Test 2: non-divisible rows AND vocab (ceil-div grids, OOB masking) ----
    N2, V2 = 12, 200
    logits2 = jax.random.normal(k3, (N2, V2), dtype=jnp.float32)
    x2 = jax.nn.log_softmax(logits2, axis=-1)
    target2 = jax.random.randint(k4, (N2,), 0, V2, dtype=jnp.int32)
    target2 = target2.at[5].set(padding_idx)

    loss2 = label_smoothing_loss(x2, target2, size=V2,
                                 padding_idx=padding_idx, smoothing=smoothing,
                                 tile_n=8, tile_v=128)
    loss2 = jax.block_until_ready(loss2)
    ref2 = _reference(x2, target2, size=V2, padding_idx=padding_idx,
                      smoothing=smoothing)
    assert jnp.allclose(loss2, ref2, rtol=1e-5, atol=1e-5), (loss2, ref2)

    # --- Test 3: bf16 input path, real 2x2 grid -------------------------------
    N3, V3 = 16, 256
    logits3 = jax.random.normal(k5, (N3, V3), dtype=jnp.float32)
    x3 = jax.nn.log_softmax(logits3, axis=-1).astype(jnp.bfloat16)
    target3 = jax.random.randint(k6, (N3,), 0, V3, dtype=jnp.int32)
    target3 = target3.at[7].set(padding_idx)

    loss3 = label_smoothing_loss(x3, target3, size=V3,
                                 padding_idx=padding_idx, smoothing=smoothing,
                                 tile_n=8, tile_v=128)
    loss3 = jax.block_until_ready(loss3)
    ref3 = _reference(x3.astype(jnp.float32), target3, size=V3,
                      padding_idx=padding_idx, smoothing=smoothing)
    assert jnp.allclose(loss3, ref3, rtol=5e-3, atol=5e-3), (loss3, ref3)

    print("KERNEL_OK")
</pallas_src>

<mosaic_0001>
module attributes {stable_mosaic.version = 11 : i64} {
  func.func @_label_smoothing_kernel(%arg0: i32, %arg1: i32, %arg2: memref<8x128xf32, #tpu.memory_space<vmem>>, %arg3: memref<8x1xi32, #tpu.memory_space<vmem>>, %arg4: memref<8x128xf32, #tpu.memory_space<vmem>>) attributes {dimension_semantics = [#tpu.dimension_semantics<parallel>, #tpu.dimension_semantics<arbitrary>], iteration_bounds = array<i64: 1, 1>, scalar_prefetch = 0 : i64, scratch_operands = 0 : i64, tpu.core_type = #tpu.core_type<tc>, window_params = [{transform_indices = @transform_0, window_bounds = array<i64: 8, 128>}, {transform_indices = @transform_1, window_bounds = array<i64: 8, 1>}, {transform_indices = @transform_2, window_bounds = array<i64: 8, 128>}]} {
    %c128_i32 = arith.constant 128 : i32
    %0 = arith.muli %arg1, %c128_i32 : i32
    %c0 = arith.constant 0 : index
    %c0_0 = arith.constant 0 : index
    %1 = vector.load %arg2[%c0, %c0_0] : memref<8x128xf32, #tpu.memory_space<vmem>>, vector<8x128xf32>
    %c0_1 = arith.constant 0 : index
    %c0_2 = arith.constant 0 : index
    %2 = vector.load %arg3[%c0_1, %c0_2] : memref<8x1xi32, #tpu.memory_space<vmem>>, vector<8x1xi32>
    %3 = tpu.iota {dimensions = array<i32: 1>} : vector<1x128xi32>
    %4 = vector.broadcast %0 : i32 to vector<8x1xi32>
    %5 = arith.subi %2, %4 : vector<8x1xi32>
    %c0_i32 = arith.constant 0 : i32
    %6 = arith.subi %c0_i32, %0 : i32
    %c32_i32 = arith.constant 32 : i32
    %7 = arith.subi %c32_i32, %0 : i32
    %c0_i32_3 = arith.constant 0 : i32
    %8 = vector.broadcast %c0_i32_3 : i32 to vector<8x1xi32>
    %9 = arith.cmpi eq, %2, %8 : vector<8x1xi32>
    %10 = vector.broadcast %6 : i32 to vector<1x128xi32>
    %11 = arith.cmpi eq, %3, %10 : vector<1x128xi32>
    %12 = vector.broadcast %7 : i32 to vector<1x128xi32>
    %13 = arith.cmpi sge, %3, %12 : vector<1x128xi32>
    %14 = arith.ori %11, %13 : vector<1x128xi1>
    %15 = vector.broadcast %9 : vector<8x1xi1> to vector<8x128xi1>
    %16 = vector.broadcast %14 : vector<1x128xi1> to vector<8x128xi1>
    %17 = arith.ori %15, %16 : vector<8x128xi1>
    %18 = vector.broadcast %3 : vector<1x128xi32> to vector<8x128xi32>
    %19 = vector.broadcast %5 : vector<8x1xi32> to vector<8x128xi32>
    %20 = arith.cmpi eq, %18, %19 : vector<8x128xi32>
    %cst = arith.constant 0.899999976 : f32
    %cst_4 = arith.constant 0.00333333341 : f32
    %21 = vector.broadcast %cst : f32 to vector<8x128xf32>
    %22 = vector.broadcast %cst_4 : f32 to vector<8x128xf32>
    %23 = arith.select %20, %21, %22 : vector<8x128xi1>, vector<8x128xf32>
    %cst_5 = arith.constant -0.0948244631 : f32
    %cst_6 = arith.constant -0.0190126076 : f32
    %24 = vector.broadcast %cst_5 : f32 to vector<8x128xf32>
    %25 = vector.broadcast %cst_6 : f32 to vector<8x128xf32>
    %26 = arith.select %20, %24, %25 : vector<8x128xi1>, vector<8x128xf32>
    %27 = arith.mulf %23, %1 : vector<8x128xf32>
    %28 = arith.subf %26, %27 : vector<8x128xf32>
    %cst_7 = arith.constant 0.000000e+00 : f32
    %29 = vector.broadcast %cst_7 : f32 to vector<8x128xf32>
    %30 = arith.select %17, %29, %28 : vector<8x128xi1>, vector<8x128xf32>
    %31 = vector.shape_cast %30 : vector<8x128xf32> to vector<1x8x128xf32>
    %cst_8 = arith.constant dense<0.000000e+00> : vector<8x128xf32>
    %32 = vector.multi_reduction <add>, %31, %cst_8 [0] : vector<1x8x128xf32> to vector<8x128xf32>
    %33 = vector.shape_cast %32 : vector<8x128xf32> to vector<8x1x128xf32>
    %cst_9 = arith.constant dense<0.000000e+00> : vector<8x128xf32>
    %34 = vector.multi_reduction <add>, %33, %cst_9 [1] : vector<8x1x128xf32> to vector<8x128xf32>
    %c0_i32_10 = arith.constant 0 : i32
    %35 = arith.cmpi eq, %arg1, %c0_i32_10 : i32
    %36 = arith.extui %35 : i1 to i32
    %c0_i32_11 = arith.constant 0 : i32
    %37 = arith.cmpi ne, %36, %c0_i32_11 : i32
    scf.if %37 {
      %cst_16 = arith.constant 0.000000e+00 : f32
      %41 = vector.broadcast %cst_16 : f32 to vector<8x128xf32>
      %c0_17 = arith.constant 0 : index
      %c0_18 = arith.constant 0 : index
      %42 = vector.load %arg4[%c0_17, %c0_18] : memref<8x128xf32, #tpu.memory_space<vmem>>, vector<8x128xf32>
      tpu.vector_store %arg4[%c0_17, %c0_18], %41 {strides = array<i32>} : memref<8x128xf32, #tpu.memory_space<vmem>>, vector<8x128xf32>,
    } else {
    }
    %c0_12 = arith.constant 0 : index
    %c0_13 = arith.constant 0 : index
    %38 = vector.load %arg4[%c0_12, %c0_13] : memref<8x128xf32, #tpu.memory_space<vmem>>, vector<8x128xf32>
    %39 = arith.addf %38, %34 : vector<8x128xf32>
    %c0_14 = arith.constant 0 : index
    %c0_15 = arith.constant 0 : index
    %40 = vector.load %arg4[%c0_14, %c0_15] : memref<8x128xf32, #tpu.memory_space<vmem>>, vector<8x128xf32>
    tpu.vector_store %arg4[%c0_14, %c0_15], %39 {strides = array<i32>} : memref<8x128xf32, #tpu.memory_space<vmem>>, vector<8x128xf32>,
    return
  }
  func.func @transform_0(%arg0: i32, %arg1: i32) -> (i32, i32) {
    %c0_i32 = arith.constant 0 : i32
    return %arg0, %arg1 : i32, i32
  }
  func.func @transform_1(%arg0: i32, %arg1: i32) -> (i32, i32) {
    %c0_i32 = arith.constant 0 : i32
    %c0_i32_0 = arith.constant 0 : i32
    return %arg0, %c0_i32 : i32, i32
  }
  func.func @transform_2(%arg0: i32, %arg1: i32) -> (i32, i32) {
    %c0_i32 = arith.constant 0 : i32
    %c0_i32_0 = arith.constant 0 : i32
    return %arg0, %c0_i32 : i32, i32
  }
}

</mosaic_0001>

<llo_original>
// kernel: tpu_custom_call.1
$region0: #{tpu_custom_call.1}
  #allocation0 [shape = 'u32[]', space=smem, size = 0x4, offset = 0x4, fixed_abs, tag = 'smem constant byte address 0x4 - core index']
  #allocation1 [shape = 'u32[144,128]{1,0:T(1,128)}', space=vmem, size = 0x12000, scoped, tag = 'internal scratch']
  %s0 = inlined_call_operand.vmem [shape: f32[8,32], index: 0, kind: input, shape index: {}]
  %s1 = inlined_call_operand.vmem [shape: s32[8,1], index: 1, kind: input, shape index: {}]
  %s2 = inlined_call_operand.hbm [shape: f32[8,128], index: 2, kind: output, shape index: {}]
  %s3 = sld [smem:[#allocation0]]
  $region22: #{tpu_custom_call.1} parent=0
    _
  %s5 = ssub.s32 1, %s3
  %s6 = scalar_select 0, %s5, %s3
  $region1: #{tpu_custom_call.1} parent=0
    #allocation2 [shape = 'u8[4096]{0}', space=vmem, size = 0x1000, scoped, tag = 'output window, operand 0, single buffered']
    #allocation3 [shape = 's32[1]{0}', space=sflag, size = 0x4, scoped, tag = 'scoped memory for tpu_custom_call.1']
    %7 = vsyncpa [#allocation3], 0
    // Predicated region
    $region2: #{tpu_custom_call.1} parent=1 // pred_check
      _
    $region3: #{tpu_custom_call.1} parent=1 // pred_check_branch
      %9 = sbr.rel (0) target = $region5
    $region4: #{tpu_custom_call.1} parent=1 // pred_region
      _
    $region5: #{tpu_custom_call.1} parent=1 // pred_fallthru
      _
    // Predicated region
    $region6: #{tpu_custom_call.1} parent=1 // pred_check
      _
    $region7: #{tpu_custom_call.1} parent=1 // pred_check_branch
      %11 = sbr.rel (0) target = $region9
    $region8: #{tpu_custom_call.1} parent=1 // pred_region
      _
    $region9: #{tpu_custom_call.1} parent=1 // pred_fallthru
      _
    %s12 = smul.u32 0, 128
    %v13 = vld [vmem:[%s0] sm:$0xff]
    %v14 = vld [vmem:[%s1] sm:$0xff]
    %v15 = vlaneseq
    %v16 = vand.u32 %v15, 127
    %v17 = vstv %s12
    %v18 = vsub.s32 %v14, %v17
    %s19 = ssub.s32 0, %s12
    %s20 = ssub.s32 32, %s12
    %vm21 = vcmp.eq.s32.totalorder %v14, 0
    %v22 = vstv %s19
    %vm23 = vcmp.eq.s32.totalorder %v16, %v22
    %v24 = vstv %s20
    %vm25 = vcmp.ge.s32.totalorder %v16, %v24
    %vm26 = vmor %vm23, %vm25
    %v27 = vsel %vm21, 1, 0
    %28 = vset.pattern.permute.xlu0 0
    %29 = vperm.xlu0 %28, %v27
    %v30 = vpop.permute.xlu0 %29
    %vm31 = vcmp.eq.s32.totalorder %v30, 1
    %v32 = vsel %vm26, 1, 0
    %vm33 = vcmp.eq.s32.totalorder %v32, 1
    %vm34 = vmor %vm31, %vm33
    %35 = vset.pattern.permute.xlu0 0
    %36 = vperm.xlu0 %35, %v18
    %v37 = vpop.permute.xlu0 %36
    %vm38 = vcmp.eq.s32.totalorder %v16, %v37
    %v39 = vsel %vm38, 0.9, 0.0033333334
    %v40 = vsel %vm38, -0.09482446, -0.019012608
    %v41 = vmul.f32 %v39, %v13
    %v42 = vsub.f32 %v40, %v41
    %v43 = vsel %vm34, 0.0, %v42
    %v44 = vadd.f32 %v43, 0.0
    %v45 = vadd.f32 %v44, 0.0
    %p46 = scmp.eq.s32.totalorder 0, 0
    // Predicated region
    $region10: #{tpu_custom_call.1} parent=1 // pred_check
      %p47 = pneg %p46
    $region11: #{tpu_custom_call.1} parent=1 // pred_check_branch
      %49 = sbr.rel (%p47) target = $region13
    $region12: #{tpu_custom_call.1} parent=1 // pred_region
      %50 = vst [vmem:[#allocation2] sm:$0xff] 0.0
    $region13: #{tpu_custom_call.1} parent=1 // pred_fallthru
      _
    %v51 = vld [vmem:[#allocation2] sm:$0xff]
    %v52 = vadd.f32 %v51, %v45
    %53 = vst [vmem:[#allocation2] sm:$0xff] %v52
    // Predicated region
    $region14: #{tpu_custom_call.1} parent=1 // pred_check
      _
    $region15: #{tpu_custom_call.1} parent=1 // pred_check_branch
      %55 = sbr.rel (0) target = $region17
    $region16: #{tpu_custom_call.1} parent=1 // pred_region
      %s57 = ssub.s32 128, 128
      %58 = vsyncadd [#allocation3], %s57
      %s60 = sshll.u32 [#allocation2], 4
      %s61 = int_to_ptr.vmem [resolvable:$true] %s60
      %63 = dma.vmem_to_hbm [thread:$0]  %s61, 128, %s2, [#allocation3]
    $region17: #{tpu_custom_call.1} parent=1 // pred_fallthru
      _
    // Predicated region
    $region18: #{tpu_custom_call.1} parent=1 // pred_check
      _
    $region19: #{tpu_custom_call.1} parent=1 // pred_check_branch
      %65 = sbr.rel (0) target = $region21
    $region20: #{tpu_custom_call.1} parent=1 // pred_region
      %66 = dma.done [#allocation3], 128
    $region21: #{tpu_custom_call.1} parent=1 // pred_fallthru
      _
    %67 = vsyncpa [#allocation3], 1

</llo_original>
